<compile_context>
chip_gen: v7x
topology: tpu7x:2x2x1
jax: 0.10.0
libtpu: 0.0.40
codegen_flags: <defaults>
</compile_context>

<pallas_src>
import jax
import jax.numpy as jnp
from jax.experimental import pallas as pl
from jax.experimental.pallas import tpu as pltpu


def _mlp_kernel_vpu_out(xT_ref, w1_ref, b1_ref, w2c_ref, b2_ref, o_ref):
    """num_outputs == 1 fast path.

    xT_ref : (num_inputs, TB)     batch on the lane axis (streams per grid step)
    w1_ref : (num_hidden, num_inputs)  resident in VMEM
    b1_ref : (num_hidden, 1)           resident in VMEM
    w2c_ref: (num_hidden, 1)           linear2 weight as a column, resident in VMEM
    b2_ref : (1,) in SMEM              scalar bias
    o_ref  : (1, TB)                   lane-dense output tile
    """
    x = xT_ref[...]
    h = jnp.dot(w1_ref[...], x, preferred_element_type=jnp.float32) + b1_ref[...]
    h = jnp.tanh(h)  # (num_hidden, TB), lane-dense -> full VPU/EUP utilization
    # Second layer: a (num_hidden, TB) x (num_hidden, 1) VPU multiply + sublane (XLU)
    # reduce instead of pushing a 1-column matmul through the MXU.
    y = jnp.sum(h * w2c_ref[...], axis=0, keepdims=True) + b2_ref[0]
    o_ref[...] = y.astype(o_ref.dtype)


def _mlp_kernel_mxu_out(xT_ref, w1_ref, b1_ref, w2_ref, b2_ref, o_ref):
    """General num_outputs path: both layers on the MXU, still batch-on-lanes.

    w2_ref : (num_outputs, num_hidden), b2_ref : (num_outputs, 1), o_ref : (num_outputs, TB)
    """
    x = xT_ref[...]
    h = jnp.dot(w1_ref[...], x, preferred_element_type=jnp.float32) + b1_ref[...]
    h = jnp.tanh(h)
    y = jnp.dot(w2_ref[...], h, preferred_element_type=jnp.float32) + b2_ref[...]
    o_ref[...] = y.astype(o_ref.dtype)


def simple_classifier_forward(x, w1, b1, w2, b2, *, block_b=2048):
    """Forward pass of SimpleClassifier.

    x : (B, num_inputs) float32
    w1: (num_hidden, num_inputs)  (PyTorch nn.Linear layout)
    b1: (num_hidden,)
    w2: (num_outputs, num_hidden)
    b2: (num_outputs,)
    returns (B, num_outputs) float32
    """
    B, num_inputs = x.shape
    num_hidden = w1.shape[0]
    num_outputs = w2.shape[0]

    # Batch tile on the lane axis: multiple of 128, large enough to amortize the
    # ~0.35 us/step grid overhead, tiny in VMEM (padded x tile ~ 32*TB bytes).
    tb = min(block_b, pl.cdiv(B, 128) * 128)
    b_pad = pl.cdiv(B, tb) * tb
    nb = b_pad // tb

    # Layout plumbing (done once by XLA outside the kernel): batch -> lane axis.
    x_t = x.T.astype(jnp.float32)  # (num_inputs, B)
    if b_pad != B:
        x_t = jnp.pad(x_t, ((0, 0), (0, b_pad - B)))

    b1_col = b1.reshape(num_hidden, 1).astype(jnp.float32)

    x_spec = pl.BlockSpec((num_inputs, tb), lambda i: (0, i))
    out_spec = pl.BlockSpec((num_outputs, tb), lambda i: (0, i))

    def resident(shape):  # same block every grid step -> stays in VMEM
        return pl.BlockSpec(shape, lambda i: (0, 0))

    if num_outputs == 1:
        kernel = _mlp_kernel_vpu_out
        w2_arg = w2.reshape(num_hidden, 1).astype(jnp.float32)  # (num_hidden, 1) column
        b2_arg = b2.reshape(num_outputs).astype(jnp.float32)    # (1,) scalar in SMEM
        w2_spec = resident((num_hidden, 1))
        b2_spec = pl.BlockSpec(memory_space=pltpu.MemorySpace.SMEM)
    else:
        kernel = _mlp_kernel_mxu_out
        w2_arg = w2.astype(jnp.float32)
        b2_arg = b2.reshape(num_outputs, 1).astype(jnp.float32)
        w2_spec = resident((num_outputs, num_hidden))
        b2_spec = resident((num_outputs, 1))

    # NOTE: for very large B on v6e/v7x, casting x/w1/w2 to bf16 (keeping
    # preferred_element_type=f32) halves DMA bytes and uses the native bf16 MXU.
    cost = pl.CostEstimate(
        flops=2 * b_pad * (num_inputs * num_hidden + num_hidden * num_outputs),
        transcendentals=b_pad * num_hidden,
        bytes_accessed=4 * (b_pad * (num_inputs + num_outputs)
                            + num_hidden * (num_inputs + num_outputs + 1)
                            + num_outputs),
    )

    out_t = pl.pallas_call(
        kernel,
        out_shape=jax.ShapeDtypeStruct((num_outputs, b_pad), jnp.float32),
        grid=(nb,),
        in_specs=[
            x_spec,
            resident((num_hidden, num_inputs)),
            resident((num_hidden, 1)),
            w2_spec,
            b2_spec,
        ],
        out_specs=out_spec,
        compiler_params=pltpu.CompilerParams(
            dimension_semantics=("parallel",),  # v7x: batch tiles across both TCs
        ),
        cost_estimate=cost,
    )(x_t, w1.astype(jnp.float32), b1_col, w2_arg, b2_arg)

    return out_t[:, :B].T  # back to (B, num_outputs)


def init_params(key, num_inputs, num_hidden, num_outputs):
    """PyTorch nn.Linear-style init: U(-1/sqrt(fan_in), 1/sqrt(fan_in)), PyTorch layouts."""
    k1, k2, k3, k4 = jax.random.split(key, 4)
    bound1 = 1.0 / (num_inputs ** 0.5)
    bound2 = 1.0 / (num_hidden ** 0.5)
    w1 = jax.random.uniform(k1, (num_hidden, num_inputs), jnp.float32, -bound1, bound1)
    b1 = jax.random.uniform(k2, (num_hidden,), jnp.float32, -bound1, bound1)
    w2 = jax.random.uniform(k3, (num_outputs, num_hidden), jnp.float32, -bound2, bound2)
    b2 = jax.random.uniform(k4, (num_outputs,), jnp.float32, -bound2, bound2)
    return w1, b1, w2, b2


if __name__ == "__main__":
    # XOR-style classifier: 2 inputs, hidden=32, 1 output. Batch=1000 (not tile-aligned)
    # with block_b=256 exercises the batch grid (4 tiles) and the padding path.
    num_inputs, num_hidden, num_outputs = 2, 32, 1
    batch = 1000

    key = jax.random.PRNGKey(0)
    kx, kp = jax.random.split(key)
    x = jax.random.normal(kx, (batch, num_inputs), jnp.float32)
    w1, b1, w2, b2 = init_params(kp, num_inputs, num_hidden, num_outputs)

    out = simple_classifier_forward(x, w1, b1, w2, b2, block_b=256)
    out = jax.block_until_ready(out)

    ref = jnp.tanh(x @ w1.T + b1) @ w2.T + b2
    assert out.shape == (batch, num_outputs)
    assert jnp.allclose(out, ref, atol=1e-5, rtol=1e-5), "mismatch vs reference (num_outputs=1 path)"

    # Also exercise the general (num_outputs > 1) MXU output path.
    num_outputs2 = 4
    w1b, b1b, w2b, b2b = init_params(jax.random.PRNGKey(1), num_inputs, num_hidden, num_outputs2)
    out2 = jax.block_until_ready(
        simple_classifier_forward(x, w1b, b1b, w2b, b2b, block_b=512))
    ref2 = jnp.tanh(x @ w1b.T + b1b) @ w2b.T + b2b
    assert out2.shape == (batch, num_outputs2)
    assert jnp.allclose(out2, ref2, atol=1e-5, rtol=1e-5), "mismatch vs reference (general path)"

    print("KERNEL_OK")
</pallas_src>

<mosaic_0001>
module attributes {stable_mosaic.version = 11 : i64} {
  func.func @_mlp_kernel_vpu_out(%arg0: i32, %arg1: memref<2x256xf32, #tpu.memory_space<vmem>>, %arg2: memref<32x2xf32, #tpu.memory_space<vmem>>, %arg3: memref<32x1xf32, #tpu.memory_space<vmem>>, %arg4: memref<32x1xf32, #tpu.memory_space<vmem>>, %arg5: memref<1xf32, #tpu.memory_space<smem>>, %arg6: memref<1x256xf32, #tpu.memory_space<vmem>>) attributes {dimension_semantics = [#tpu.dimension_semantics<parallel>], iteration_bounds = array<i64: 4>, scalar_prefetch = 0 : i64, scratch_operands = 0 : i64, tpu.core_type = #tpu.core_type<tc>, window_params = [{transform_indices = @transform_0, window_bounds = array<i64: 2, 256>}, {pipeline_mode = #tpu.pipeline_mode<synchronous>, transform_indices = @transform_1, window_bounds = array<i64: 32, 2>}, {pipeline_mode = #tpu.pipeline_mode<synchronous>, transform_indices = @transform_2, window_bounds = array<i64: 32, 1>}, {pipeline_mode = #tpu.pipeline_mode<synchronous>, transform_indices = @transform_3, window_bounds = array<i64: 32, 1>}, {transform_indices = @transform_4, window_bounds = array<i64: 1>}, {transform_indices = @transform_5, window_bounds = array<i64: 1, 256>}]} {
    %c0 = arith.constant 0 : index
    %c0_0 = arith.constant 0 : index
    %0 = vector.load %arg1[%c0, %c0_0] : memref<2x256xf32, #tpu.memory_space<vmem>>, vector<2x256xf32>
    %c0_1 = arith.constant 0 : index
    %c0_2 = arith.constant 0 : index
    %1 = vector.load %arg2[%c0_1, %c0_2] : memref<32x2xf32, #tpu.memory_space<vmem>>, vector<32x2xf32>
    %cst = arith.constant dense<0.000000e+00> : vector<32x256xf32>
    %2 = tpu.matmul %1, %0, %cst {dimension_numbers = #tpu.dot_dimension_numbers<[1], [0], [0], [1], [0, 0, 1, 1], [], []>} : vector<32x2xf32>, vector<2x256xf32>, vector<32x256xf32> -> vector<32x256xf32>
    %c0_3 = arith.constant 0 : index
    %c0_4 = arith.constant 0 : index
    %3 = vector.load %arg3[%c0_3, %c0_4] : memref<32x1xf32, #tpu.memory_space<vmem>>, vector<32x1xf32>
    %4 = vector.broadcast %3 : vector<32x1xf32> to vector<32x256xf32>
    %5 = arith.addf %2, %4 : vector<32x256xf32>
    %6 = math.tanh %5 : vector<32x256xf32>
    %c0_5 = arith.constant 0 : index
    %c0_6 = arith.constant 0 : index
    %7 = vector.load %arg4[%c0_5, %c0_6] : memref<32x1xf32, #tpu.memory_space<vmem>>, vector<32x1xf32>
    %8 = vector.broadcast %7 : vector<32x1xf32> to vector<32x256xf32>
    %9 = arith.mulf %6, %8 : vector<32x256xf32>
    %cst_7 = arith.constant dense<0.000000e+00> : vector<256xf32>
    %10 = vector.multi_reduction <add>, %9, %cst_7 [0] : vector<32x256xf32> to vector<256xf32>
    %11 = vector.shape_cast %10 : vector<256xf32> to vector<1x256xf32>
    %c0_8 = arith.constant 0 : index
    %12 = memref.load %arg5[%c0_8] : memref<1xf32, #tpu.memory_space<smem>>
    %13 = vector.broadcast %12 : f32 to vector<1x256xf32>
    %14 = arith.addf %11, %13 : vector<1x256xf32>
    %c0_9 = arith.constant 0 : index
    %c0_10 = arith.constant 0 : index
    %15 = vector.load %arg6[%c0_9, %c0_10] : memref<1x256xf32, #tpu.memory_space<vmem>>, vector<1x256xf32>
    tpu.vector_store %arg6[%c0_9, %c0_10], %14 {strides = array<i32>} : memref<1x256xf32, #tpu.memory_space<vmem>>, vector<1x256xf32>,
    return
  }
  func.func @transform_0(%arg0: i32) -> (i32, i32) {
    %c0_i32 = arith.constant 0 : i32
    %c0_i32_0 = arith.constant 0 : i32
    return %c0_i32, %arg0 : i32, i32
  }
  func.func @transform_1(%arg0: i32) -> (i32, i32) {
    %c0_i32 = arith.constant 0 : i32
    %c0_i32_0 = arith.constant 0 : i32
    %c0_i32_1 = arith.constant 0 : i32
    return %c0_i32, %c0_i32_0 : i32, i32
  }
  func.func @transform_2(%arg0: i32) -> (i32, i32) {
    %c0_i32 = arith.constant 0 : i32
    %c0_i32_0 = arith.constant 0 : i32
    %c0_i32_1 = arith.constant 0 : i32
    return %c0_i32, %c0_i32_0 : i32, i32
  }
  func.func @transform_3(%arg0: i32) -> (i32, i32) {
    %c0_i32 = arith.constant 0 : i32
    %c0_i32_0 = arith.constant 0 : i32
    %c0_i32_1 = arith.constant 0 : i32
    return %c0_i32, %c0_i32_0 : i32, i32
  }
  func.func @transform_4(%arg0: i32) -> i32 {
    %c0_i32 = arith.constant 0 : i32
    %c0_i32_0 = arith.constant 0 : i32
    return %c0_i32 : i32
  }
  func.func @transform_5(%arg0: i32) -> (i32, i32) {
    %c0_i32 = arith.constant 0 : i32
    %c0_i32_0 = arith.constant 0 : i32
    return %c0_i32, %arg0 : i32, i32
  }
}

</mosaic_0001>

<llo_original>
// kernel: tpu_custom_call.1
$region0: #{tpu_custom_call.1}
  #allocation0 [shape = 'u32[]', space=smem, size = 0x4, offset = 0x4, fixed_abs, tag = 'smem constant byte address 0x4 - core index']
  #allocation1 [shape = 'u32[144,128]{1,0:T(1,128)}', space=vmem, size = 0x12000, scoped, tag = 'internal scratch']
  #allocation2 [shape = 'f32[1]{0:T(128)S(6)}', space=smem, size = 0x200, scoped, tag = 'scoped memory for tpu_custom_call.1']
  %s0 = inlined_call_operand.vmem [shape: f32[2,1024], index: 0, kind: input, shape index: {}]
  %s1 = inlined_call_operand.vmem [shape: f32[32,2], index: 1, kind: input, shape index: {}]
  %s2 = inlined_call_operand.vmem [shape: f32[32,1], index: 2, kind: input, shape index: {}]
  %s3 = inlined_call_operand.vmem [shape: f32[32,1], index: 3, kind: input, shape index: {}]
  %s4 = inlined_call_operand.<no memory space> [shape: f32[1], index: 4, kind: input, shape index: {}]
  %s5 = inlined_call_operand.hbm [shape: f32[1,1024], index: 5, kind: output, shape index: {}]
  %s6 = sld [smem:[#allocation0]]
  $region53: #{tpu_custom_call.1} parent=0
    _
  %s8 = ssub.s32 1, %s6
  %s9 = scalar_select 0, %s8, %s6
  %10 = sst [smem:[#allocation2]] %s4
  $region1: #{tpu_custom_call.1} parent=0
    #allocation3 [shape = 'u8[2048]{0}', space=vmem, size = 0x800, scoped, tag = 'output window, operand 0']
    #allocation4 [shape = 's32[2]{0}', space=sflag, size = 0x8, scoped, tag = 'scoped memory for tpu_custom_call.1']
    %11 = vsyncpa [#allocation4], 0
    %s12 = scalar_lea.sflag [#allocation4], 1
    %13 = vsyncpa %s12, 0
    loop: start=0, step=1, limit=6
    $region2: #{tpu_custom_call.1} parent=1 // loop_pre_header
      _
    $region3: #{tpu_custom_call.1} parent=1 // loop_header
      %s15 = sphi 0, %s19
      %p16 = scmp.ge.s32.totalorder %s15, 6
      %s25 = sphi 0, %s27
      %s28 = sphi 0, %s25
      %s29 = sphi 0, %s28
      %s45 = sphi 0, %s29
      %s49 = sphi 0, %s49
      %s51 = sphi 0, %s49
      %s52 = sphi 0, %s51
      %s66 = sphi 0, %s52
      %s70 = sphi 0, %s70
      %s72 = sphi 0, %s70
      %s73 = sphi 0, %s72
      %s87 = sphi 0, %s73
      %s91 = sphi 0, %s91
      %s93 = sphi 0, %s91
      %s94 = sphi 0, %s93
      %s108 = sphi 0, %s94
      %s112 = sphi 0, %s112
      %s114 = sphi 0, %s112
      %s115 = sphi 0, %s114
      %s129 = sphi 0, %s115
      %s135 = sphi 0, %s137
      %s138 = sphi 0, %s135
      %s139 = sphi 0, %s138
      %s155 = sphi 0, %s139
    $region4: #{tpu_custom_call.1} parent=1 // loop_header_branch
      %18 = sbr.rel (%p16) target = $region8
    $region5: #{tpu_custom_call.1} parent=1 // loop_body
      %s20 = ssub.s32 %s15, 1
      %s21 = ssub.s32 %s15, 2
      %s22 = sadd.s32 %s15, 1
      %s23 = ssub.s32 %s15, %s22
      %p24 = scmp.eq.s32.totalorder %s23, 0
      %s26 = sadd.s32 %s25, 1
      %s27 = scalar_select %p24, %s25, %s26
      %p30 = pneg %p24
      %p31 = scmp.eq.s32.totalorder %s15, 3
      %p32 = por %p30, %p31
      %p33 = scmp.ne.s32.totalorder %s25, %s28
      %p34 = scmp.eq.s32.totalorder %s15, 0
      %p35 = por %p33, %p34
      %p36 = scmp.ne.s32.totalorder %s25, %s28
      %p37 = scmp.eq.s32.totalorder %s20, 3
      %p38 = por %p36, %p37
      %p39 = scmp.ne.s32.totalorder %s28, %s29
      %p40 = scmp.eq.s32.totalorder %s20, 0
      %p41 = por %p39, %p40
      %p42 = scmp.ne.s32.totalorder %s28, %s29
      %p43 = scmp.eq.s32.totalorder %s21, 3
      %p44 = por %p42, %p43
      %p46 = scmp.ne.s32.totalorder %s29, %s45
      %p47 = scmp.eq.s32.totalorder %s21, 0
      %p48 = por %p46, %p47
      %s50 = sadd.s32 %s49, 1
      %p53 = scmp.eq.s32.totalorder %s15, 3
      %p54 = scmp.ne.s32.totalorder %s49, %s51
      %p55 = scmp.eq.s32.totalorder %s15, 0
      %p56 = por %p54, %p55
      %p57 = scmp.ne.s32.totalorder %s49, %s51
      %p58 = scmp.eq.s32.totalorder %s20, 3
      %p59 = por %p57, %p58
      %p60 = scmp.ne.s32.totalorder %s51, %s52
      %p61 = scmp.eq.s32.totalorder %s20, 0
      %p62 = por %p60, %p61
      %p63 = scmp.ne.s32.totalorder %s51, %s52
      %p64 = scmp.eq.s32.totalorder %s21, 3
      %p65 = por %p63, %p64
      %p67 = scmp.ne.s32.totalorder %s52, %s66
      %p68 = scmp.eq.s32.totalorder %s21, 0
      %p69 = por %p67, %p68
      %s71 = sadd.s32 %s70, 1
      %p74 = scmp.eq.s32.totalorder %s15, 3
      %p75 = scmp.ne.s32.totalorder %s70, %s72
      %p76 = scmp.eq.s32.totalorder %s15, 0
      %p77 = por %p75, %p76
      %p78 = scmp.ne.s32.totalorder %s70, %s72
      %p79 = scmp.eq.s32.totalorder %s20, 3
      %p80 = por %p78, %p79
      %p81 = scmp.ne.s32.totalorder %s72, %s73
      %p82 = scmp.eq.s32.totalorder %s20, 0
      %p83 = por %p81, %p82
      %p84 = scmp.ne.s32.totalorder %s72, %s73
      %p85 = scmp.eq.s32.totalorder %s21, 3
      %p86 = por %p84, %p85
      %p88 = scmp.ne.s32.totalorder %s73, %s87
      %p89 = scmp.eq.s32.totalorder %s21, 0
      %p90 = por %p88, %p89
      %s92 = sadd.s32 %s91, 1
      %p95 = scmp.eq.s32.totalorder %s15, 3
      %p96 = scmp.ne.s32.totalorder %s91, %s93
      %p97 = scmp.eq.s32.totalorder %s15, 0
      %p98 = por %p96, %p97
      %p99 = scmp.ne.s32.totalorder %s91, %s93
      %p100 = scmp.eq.s32.totalorder %s20, 3
      %p101 = por %p99, %p100
      %p102 = scmp.ne.s32.totalorder %s93, %s94
      %p103 = scmp.eq.s32.totalorder %s20, 0
      %p104 = por %p102, %p103
      %p105 = scmp.ne.s32.totalorder %s93, %s94
      %p106 = scmp.eq.s32.totalorder %s21, 3
      %p107 = por %p105, %p106
      %p109 = scmp.ne.s32.totalorder %s94, %s108
      %p110 = scmp.eq.s32.totalorder %s21, 0
      %p111 = por %p109, %p110
      %s113 = sadd.s32 %s112, 1
      %p116 = scmp.eq.s32.totalorder %s15, 3
      %p117 = scmp.ne.s32.totalorder %s112, %s114
      %p118 = scmp.eq.s32.totalorder %s15, 0
      %p119 = por %p117, %p118
      %p120 = scmp.ne.s32.totalorder %s112, %s114
      %p121 = scmp.eq.s32.totalorder %s20, 3
      %p122 = por %p120, %p121
      %p123 = scmp.ne.s32.totalorder %s114, %s115
      %p124 = scmp.eq.s32.totalorder %s20, 0
      %p125 = por %p123, %p124
      %p126 = scmp.ne.s32.totalorder %s114, %s115
      %p127 = scmp.eq.s32.totalorder %s21, 3
      %p128 = por %p126, %p127
      %p130 = scmp.ne.s32.totalorder %s115, %s129
      %p131 = scmp.eq.s32.totalorder %s21, 0
      %p132 = por %p130, %p131
      %s133 = ssub.s32 %s15, %s22
      %p134 = scmp.eq.s32.totalorder %s133, 0
      %s136 = sadd.s32 %s135, 1
      %s137 = scalar_select %p134, %s135, %s136
      %p140 = pneg %p134
      %p141 = scmp.eq.s32.totalorder %s15, 3
      %p142 = por %p140, %p141
      %p143 = scmp.ne.s32.totalorder %s135, %s138
      %p144 = scmp.eq.s32.totalorder %s15, 0
      %p145 = por %p143, %p144
      %p146 = scmp.ne.s32.totalorder %s135, %s138
      %p147 = scmp.eq.s32.totalorder %s20, 3
      %p148 = por %p146, %p147
      %p149 = scmp.ne.s32.totalorder %s138, %s139
      %p150 = scmp.eq.s32.totalorder %s20, 0
      %p151 = por %p149, %p150
      %p152 = scmp.ne.s32.totalorder %s138, %s139
      %p153 = scmp.eq.s32.totalorder %s21, 3
      %p154 = por %p152, %p153
      %p156 = scmp.ne.s32.totalorder %s139, %s155
      %p157 = scmp.eq.s32.totalorder %s21, 0
      %p158 = por %p156, %p157
      %p159 = scmp.le.s32.totalorder 1, %s15
      %p160 = scmp.lt.s32.totalorder %s15, 5
      %p161 = pnand %p159, %p160
      %p162 = pneg %p161
      // Predicated region
      $region9: #{tpu_custom_call.1} parent=5 // pred_check
        _
      $region10: #{tpu_custom_call.1} parent=5 // pred_check_branch
        %164 = sbr.rel (%p161) target = $region12
      $region11: #{tpu_custom_call.1} parent=5 // pred_region
        %s165 = ssub.s32 %s15, 1
        // Predicated region
        $region13: #{tpu_custom_call.1} parent=11 // pred_check
          %p166 = pneg %p62
        $region14: #{tpu_custom_call.1} parent=11 // pred_check_branch
          %168 = sbr.rel (%p166) target = $region16
        $region15: #{tpu_custom_call.1} parent=11 // pred_region
          _
        $region16: #{tpu_custom_call.1} parent=11 // pred_fallthru
          _
        // Predicated region
        $region17: #{tpu_custom_call.1} parent=11 // pred_check
          %p169 = pneg %p83
        $region18: #{tpu_custom_call.1} parent=11 // pred_check_branch
          %171 = sbr.rel (%p169) target = $region20
        $region19: #{tpu_custom_call.1} parent=11 // pred_region
          _
        $region20: #{tpu_custom_call.1} parent=11 // pred_fallthru
          _
        // Predicated region
        $region21: #{tpu_custom_call.1} parent=11 // pred_check
          %p172 = pneg %p104
        $region22: #{tpu_custom_call.1} parent=11 // pred_check_branch
          %174 = sbr.rel (%p172) target = $region24
        $region23: #{tpu_custom_call.1} parent=11 // pred_region
          _
        $region24: #{tpu_custom_call.1} parent=11 // pred_fallthru
          _
        // Predicated region
        $region25: #{tpu_custom_call.1} parent=11 // pred_check
          %p175 = pneg %p125
        $region26: #{tpu_custom_call.1} parent=11 // pred_check_branch
          %177 = sbr.rel (%p175) target = $region28
        $region27: #{tpu_custom_call.1} parent=11 // pred_region
          _
        $region28: #{tpu_custom_call.1} parent=11 // pred_fallthru
          _
      $region12: #{tpu_custom_call.1} parent=5 // pred_fallthru
        _
      %p178 = scmp.lt.s32.totalorder %s15, 4
      // Predicated region
      $region29: #{tpu_custom_call.1} parent=5 // pred_check
        %p179 = pneg %p178
      $region30: #{tpu_custom_call.1} parent=5 // pred_check_branch
        %181 = sbr.rel (%p179) target = $region32
      $region31: #{tpu_custom_call.1} parent=5 // pred_region
        // Predicated region
        $region33: #{tpu_custom_call.1} parent=31 // pred_check
          %p182 = pneg %p35
        $region34: #{tpu_custom_call.1} parent=31 // pred_check_branch
          %184 = sbr.rel (%p182) target = $region36
        $region35: #{tpu_custom_call.1} parent=31 // pred_region
          %s185 = smul.u32 2, %s15
          %p186 = scmp.lt.s32.totalorder %s185, 7
          %s187 = scalar_select %p186, %s185, 7
          %s188 = smul.addr %s187, 2
          %s189 = scalar_lea.vmem %s0, %s188
          %s190 = smul.u32 2, %s15
        $region36: #{tpu_custom_call.1} parent=31 // pred_fallthru
          _
      $region32: #{tpu_custom_call.1} parent=5 // pred_fallthru
        _
      %p191 = scmp.le.s32.totalorder 1, %s15
      %p192 = scmp.lt.s32.totalorder %s15, 5
      %p193 = pnand %p191, %p192
      %p194 = pneg %p193
      // Predicated region
      $region37: #{tpu_custom_call.1} parent=5 // pred_check
        _
      $region38: #{tpu_custom_call.1} parent=5 // pred_check_branch
        %196 = sbr.rel (%p193) target = $region40
      $region39: #{tpu_custom_call.1} parent=5 // pred_region
        %s197 = ssub.s32 %s15, 1
        %s198 = smul.u32 2, %s20
        %p199 = scmp.lt.s32.totalorder %s198, 7
        %s200 = scalar_select %p199, %s198, 7
        %s201 = smul.addr %s200, 2
        %s202 = scalar_lea.vmem %s0, %s201
        %p203 = pneg %p41
        %p204 = pneg %p38
        %p205 = pneg %p62
        %p206 = pneg %p59
        %p207 = pneg %p83
        %p208 = pneg %p80
        %p209 = pneg %p104
        %p210 = pneg %p101
        %p211 = pneg %p125
        %p212 = pneg %p122
        %p213 = pneg %p151
        %p214 = pneg %p148
        %s215 = sand.u32 %s138, 1
        %s216 = scalar_lea.sflag [#allocation4], %s215
        %s217 = sand.u32 %s138, 1
        %s218 = smul.addr %s217, 2
        %s219 = scalar_lea.vmem [#allocation3], %s218
        %s220 = smul.u32 2, %s20
        %p221 = scmp.lt.s32.totalorder %s220, 7
        %s222 = scalar_select %p221, %s220, 7
        %s223 = smul.addr %s222, 2
        %s224 = scalar_lea.vmem %s0, %s223
        %s225 = smul.u32 2, %s20
        %s226 = smul.u32 2, %s20
        %v227 = vld [vmem:[%s224] sm:$0xf]
        %v228 = vld [vmem:[%s1] sm:$0xff]
        %v229 = vld [vmem:[%s1 + $0x8] sm:$0xff]
        %v230 = vld [vmem:[%s1 + $0x10] sm:$0xff]
        %v231 = vld [vmem:[%s1 + $0x18] sm:$0xff]
        %v232 = vld [vmem:[%s2] sm:$0xff]
        %v233 = vld [vmem:[%s2 + $0x8] sm:$0xff]
        %v234 = vld [vmem:[%s2 + $0x10] sm:$0xff]
        %v235 = vld [vmem:[%s2 + $0x18] sm:$0xff]
        %237 = vset.pattern.permute.xlu0 0
        %238 = vperm.xlu0 %237, %v232
        %v239 = vpop.permute.xlu0 %238
        %242 = vset.pattern.permute.xlu0 0
        %243 = vperm.xlu0 %242, %v233
        %v244 = vpop.permute.xlu0 %243
        %247 = vset.pattern.permute.xlu0 0
        %248 = vperm.xlu0 %247, %v234
        %v249 = vpop.permute.xlu0 %248
        %252 = vset.pattern.permute.xlu0 0
        %253 = vperm.xlu0 %252, %v235
        %v254 = vpop.permute.xlu0 %253
        %v258 = vunpack.c.l.s4 1983009808
        %v259 = vunpack.c.0.s8 %v258
        %v260 = vlaneseq
        %v261 = vshrl.u32 %v260, 7
        %v262 = vsub.s32 %v259, %v261
        %v263 = vrot.slane %v227, %v262
        %v264 = vcombine.high %v263, %v263
        %vm265 = vcmask 15360
        %v267 = vsel %vm265, %v228, 0
        %v270 = vsel %vm265, %v229, 0
        %v273 = vsel %vm265, %v230, 0
        %v276 = vsel %vm265, %v231, 0
        %vm278 = vcmask 1041408
        %v279 = vsel %vm278, %v263, 0
        %v281 = vsel %vm278, %v264, 0
        %283 = vmatprep.subr.mxu0 %v281
        %284 = vmatpush1.msra.mxu0 %v279
        %285 = vmatprep.subr.mxu0 0.0
        %286 = vmatpush1.msra.mxu0 0.0
        %287 = vmatprep.subr.mxu0 0.0
        %288 = vmatpush1.msra.mxu0 0.0
        %289 = vmatprep.subr.mxu0 0.0
        %290 = vmatpush1.msra.mxu0 0.0
        %291 = vmatprep.subr.mxu0 0.0
        %292 = vmatpush1.msra.mxu0 0.0
        %293 = vmatprep.subr.mxu0 0.0
        %294 = vmatpush1.msra.mxu0 0.0
        %295 = vmatprep.subr.mxu0 0.0
        %296 = vmatpush1.msra.mxu0 0.0
        %297 = vmatprep.subr.mxu0 0.0
        %298 = vmatpush1.msra.mxu0 0.0
        %299 = vmatprep.subr.mxu0 0.0
        %300 = vmatpush1.msra.mxu0 0.0
        %301 = vmatprep.subr.mxu0 0.0
        %302 = vmatpush1.msra.mxu0 0.0
        %303 = vmatprep.subr.mxu0 0.0
        %304 = vmatpush1.msra.mxu0 0.0
        %305 = vmatprep.subr.mxu0 0.0
        %306 = vmatpush1.msra.mxu0 0.0
        %307 = vmatprep.subr.mxu0 0.0
        %308 = vmatpush1.msra.mxu0 0.0
        %309 = vmatprep.subr.mxu0 0.0
        %310 = vmatpush1.msra.mxu0 0.0
        %311 = vmatprep.subr.mxu0 0.0
        %312 = vmatpush1.msra.mxu0 0.0
        %313 = vmatprep.subr.mxu0 0.0
        %314 = vmatpush1.msra.mxu0 0.0
        %315 = vmatprep.subr.mxu0 0.0
        %316 = vmatpush1.msra.mxu0 0.0
        %317 = vmatprep.subr.mxu0 0.0
        %318 = vmatpush1.msra.mxu0 0.0
        %319 = vmatprep.subr.mxu0 0.0
        %320 = vmatpush1.msra.mxu0 0.0
        %321 = vmatprep.subr.mxu0 0.0
        %322 = vmatpush1.msra.mxu0 0.0
        %323 = vmatprep.subr.mxu0 0.0
        %324 = vmatpush1.msra.mxu0 0.0
        %325 = vmatprep.subr.mxu0 0.0
        %326 = vmatpush1.msra.mxu0 0.0
        %327 = vmatprep.subr.mxu0 0.0
        %328 = vmatpush1.msra.mxu0 0.0
        %329 = vmatprep.subr.mxu0 0.0
        %330 = vmatpush1.msra.mxu0 0.0
        %331 = vmatprep.subr.mxu0 0.0
        %332 = vmatpush1.msra.mxu0 0.0
        %333 = vmatprep.subr.mxu0 0.0
        %334 = vmatpush1.msra.mxu0 0.0
        %335 = vmatprep.subr.mxu0 0.0
        %336 = vmatpush1.msra.mxu0 0.0
        %337 = vmatprep.subr.mxu0 0.0
        %338 = vmatpush1.msra.mxu0 0.0
        %339 = vmatprep.subr.mxu0 0.0
        %340 = vmatpush1.msra.mxu0 0.0
        %341 = vmatprep.subr.mxu0 0.0
        %342 = vmatpush1.msra.mxu0 0.0
        %343 = vmatprep.subr.mxu0 0.0
        %344 = vmatpush1.msra.mxu0 0.0
        %345 = vmatprep.subr.mxu0 0.0
        %346 = vmatpush1.msra.mxu0 0.0
        %347 = vmatprep.mubr.f32.mxu0 0.0
        %348 = vmatmul.mubr.f32.gmra.mrb[0].mxu0 %v267
        %v349 = vpop.f32.mrb[0].mxu0
        %v350 = vadd.f32 %v239, %v349
        %v351 = vpop.f32.mrb[0].mxu0
        %v352 = vadd.f32 %v239, %v351
        %353 = vmatprep.mubr.f32.mxu0 0.0
        %354 = vmatmul.mubr.f32.gmra.mrb[0].mxu0 %v270
        %v355 = vpop.f32.mrb[0].mxu0
        %v356 = vadd.f32 %v244, %v355
        %v357 = vpop.f32.mrb[0].mxu0
        %v358 = vadd.f32 %v244, %v357
        %359 = vmatprep.mubr.f32.mxu0 0.0
        %360 = vmatmul.mubr.f32.gmra.mrb[0].mxu0 %v273
        %v361 = vpop.f32.mrb[0].mxu0
        %v362 = vadd.f32 %v249, %v361
        %v363 = vpop.f32.mrb[0].mxu0
        %v364 = vadd.f32 %v249, %v363
        %365 = vmatprep.mubr.f32.mxu0 0.0
        %366 = vmatmul.mubr.f32.gmra.mrb[0].mxu0 %v276
        %v367 = vpop.f32.mrb[0].mxu0
        %v368 = vadd.f32 %v254, %v367
        %v369 = vpop.f32.mrb[0].mxu0
        %v370 = vadd.f32 %v254, %v369
        %371 = vdwg.mxu0
        %v372 = vtanh.pop %v350
        %v373 = vtanh.pop %v352
        %v374 = vtanh.pop %v356
        %v375 = vtanh.pop %v358
        %v376 = vtanh.pop %v362
        %v377 = vtanh.pop %v364
        %v378 = vtanh.pop %v368
        %v379 = vtanh.pop %v370
        %v380 = vld [vmem:[%s3] sm:$0xff]
        %v381 = vld [vmem:[%s3 + $0x8] sm:$0xff]
        %v382 = vld [vmem:[%s3 + $0x10] sm:$0xff]
        %v383 = vld [vmem:[%s3 + $0x18] sm:$0xff]
        %385 = vset.pattern.permute.xlu0 0
        %386 = vperm.xlu0 %385, %v380
        %v387 = vpop.permute.xlu0 %386
        %390 = vset.pattern.permute.xlu0 0
        %391 = vperm.xlu0 %390, %v381
        %v392 = vpop.permute.xlu0 %391
        %395 = vset.pattern.permute.xlu0 0
        %396 = vperm.xlu0 %395, %v382
        %v397 = vpop.permute.xlu0 %396
        %400 = vset.pattern.permute.xlu0 0
        %401 = vperm.xlu0 %400, %v383
        %v402 = vpop.permute.xlu0 %401
        %v404 = vmul.f32 %v372, %v387
        %v405 = vmul.f32 %v373, %v387
        %v406 = vmul.f32 %v374, %v392
        %v407 = vmul.f32 %v375, %v392
        %v408 = vmul.f32 %v376, %v397
        %v409 = vmul.f32 %v377, %v397
        %v410 = vmul.f32 %v378, %v402
        %v411 = vmul.f32 %v379, %v402
        %v412 = vadd.f32 %v404, %v406
        %v413 = vadd.f32 %v412, %v408
        %v414 = vadd.f32 %v413, %v410
        %v415 = vrot.slane %v414, 4
        %v416 = vadd.f32 %v414, %v415
        %v417 = vrot.slane %v416, 2
        %v418 = vadd.f32 %v416, %v417
        %v419 = vrot.slane %v418, 1
        %v420 = vadd.f32 %v418, %v419
        %v421 = vadd.f32 %v405, %v407
        %v422 = vadd.f32 %v421, %v409
        %v423 = vadd.f32 %v422, %v411
        %v424 = vrot.slane %v423, 4
        %v425 = vadd.f32 %v423, %v424
        %v426 = vrot.slane %v425, 2
        %v427 = vadd.f32 %v425, %v426
        %v428 = vrot.slane %v427, 1
        %v429 = vadd.f32 %v427, %v428
        %s430 = sld [smem:[#allocation2]]
        %v431 = vstv %s430
        %v432 = vadd.f32 %v420, %v431
        %v433 = vadd.f32 %v429, %v431
        %v436 = vcombine.low %v432, %v433
        %v438 = vunpack.c.l.s4 1966171168
        %v439 = vunpack.c.0.s8 %v438
        %v440 = vlaneseq
        %v441 = vshrl.u32 %v440, 7
        %v442 = vsub.s32 %v439, %v441
        %v443 = vrot.slane %v436, %v442
        %v445 = vunpack.c.l.s4 1966171168
        %v446 = vunpack.c.0.s8 %v445
        %v447 = vlaneseq
        %v448 = vshrl.u32 %v447, 7
        %v449 = vsub.s32 %v446, %v448
        %v450 = vrot.slane %v443, %v449
        %v452 = vlaneseq
        %vm453 = vcmp.ge.s32.totalorder %v452, 0
        %vm454 = vcmp.lt.s32.totalorder %v452, 256
        %vm455 = vmand %vm453, %vm454
        %456 = vst.msk [vmem:[%s219] sm:$0x3] %vm455, %v450
        %s457 = sand.u32 %s138, 1
        %s458 = scalar_lea.sflag [#allocation4], %s457
        %s459 = sand.u32 %s138, 1
        %s460 = smul.addr %s459, 2
        %s461 = scalar_lea.vmem [#allocation3], %s460
        // Predicated region
        $region41: #{tpu_custom_call.1} parent=39 // pred_check
          %p462 = pneg %p148
        $region42: #{tpu_custom_call.1} parent=39 // pred_check_branch
          %464 = sbr.rel (%p462) target = $region44
        $region43: #{tpu_custom_call.1} parent=39 // pred_region
          %s465 = smul.u32 2, %s20
          %s467 = ssub.s32 32, 32
          %468 = vsyncadd %s458, %s467
          %s469 = smul.addr %s465, 16
          %s470 = scalar_lea.hbm %s5, %s469
          %s472 = sshll.u32 %s461, 4
          %s473 = int_to_ptr.vmem [resolvable:$true] %s472
          %475 = dma.vmem_to_hbm [thread:$0]  %s473, 32, %s470, %s458
        $region44: #{tpu_custom_call.1} parent=39 // pred_fallthru
          _
      $region40: #{tpu_custom_call.1} parent=5 // pred_fallthru
        _
      %p476 = scmp.le.s32.totalorder 2, %s15
      // Predicated region
      $region45: #{tpu_custom_call.1} parent=5 // pred_check
        %p477 = pneg %p476
      $region46: #{tpu_custom_call.1} parent=5 // pred_check_branch
        %479 = sbr.rel (%p477) target = $region48
      $region47: #{tpu_custom_call.1} parent=5 // pred_region
        %s480 = ssub.s32 %s15, 2
        // Predicated region
        $region49: #{tpu_custom_call.1} parent=47 // pred_check
          %p481 = pneg %p154
        $region50: #{tpu_custom_call.1} parent=47 // pred_check_branch
          %483 = sbr.rel (%p481) target = $region52
        $region51: #{tpu_custom_call.1} parent=47 // pred_region
          %s484 = sand.u32 %s139, 1
          %s485 = scalar_lea.sflag [#allocation4], %s484
          %s486 = sand.u32 %s139, 1
          %s487 = smul.addr %s486, 2
          %s488 = scalar_lea.vmem [#allocation3], %s487
          %489 = dma.done %s485, 32
        $region52: #{tpu_custom_call.1} parent=47 // pred_fallthru
          _
      $region48: #{tpu_custom_call.1} parent=5 // pred_fallthru
        _
    $region6: #{tpu_custom_call.1} parent=1 // loop_footer
      %s19 = sadd.s32 1, %s15
    $region7: #{tpu_custom_call.1} parent=1 // loop_footer_branch
      %14 = sbr.rel target = $region3
    $region8: #{tpu_custom_call.1} parent=1 // loop_exit
      _
    %490 = vsyncpa [#allocation4], 1
    %s491 = scalar_lea.sflag [#allocation4], 1
    %492 = vsyncpa %s491, 1

</llo_original>
